<compile_context>
chip_gen: v5e
topology: v5e:2x2
jax: 0.10.0
libtpu: 0.0.40
codegen_flags: <defaults>
</compile_context>

<pallas_src>
import functools
import math

import jax
import jax.numpy as jnp
from jax import lax
from jax.experimental import pallas as pl
from jax.experimental.pallas import tpu as pltpu


# --------------------------------------------------------------------------
# small helpers
# --------------------------------------------------------------------------

def _round_up(n, m):
    return ((n + m - 1) // m) * m


def _pad128(n):
    return _round_up(n, 128)


def _row_tile(n, target=512):
    """Row tile: multiple of 8, <= target, and >=2 grid steps when possible."""
    t = min(target, _round_up(n, 8))
    if n > 8 and t >= _round_up(n, 8):
        # would be a single grid step -> halve so both v7x TCs / pipeline get work
        t = _round_up((n + 1) // 2, 8)
    return max(t, 8)


def _q_tile(qpad, target=128):
    """Query tile: multiple of 8 dividing qpad (qpad is a multiple of 8)."""
    cap = min(target, qpad)
    cap -= cap % 8
    for t in range(cap, 7, -8):
        if qpad % t == 0:
            return t
    return 8


def _vmem_limit(estimate_bytes):
    """Derived per-kernel scoped-VMEM limit; stays under v7x's 64 MiB physical."""
    return int(min(64 * 1024 * 1024, max(16 * 1024 * 1024, 2 * estimate_bytes)))


# --------------------------------------------------------------------------
# Pallas kernels
# --------------------------------------------------------------------------

def _input_proj_kernel(x_ref, w_ref, b_ref, mem_ref):
    # 1x1 conv == per-pixel matmul (bf16 operands, f32 accumulation).
    proj = jnp.dot(x_ref[...], w_ref[...],
                   preferred_element_type=jnp.float32) + b_ref[...]
    mem_ref[...] = proj.astype(mem_ref.dtype)


def pallas_input_proj(x, w, b, tn):
    """x: (Npad, C) bf16, w: (C, D) bf16, b: (1, D) f32 -> memory (Npad, D) bf16."""
    Npad, C = x.shape
    D = w.shape[1]
    assert Npad % tn == 0
    est = 2 * tn * C * 2 + C * D * 2 + D * 4 + 2 * tn * D * 2
    flops = 2 * Npad * C * D
    bytes_accessed = Npad * C * 2 + C * D * 2 + D * 4 + Npad * D * 2
    return pl.pallas_call(
        _input_proj_kernel,
        out_shape=jax.ShapeDtypeStruct((Npad, D), jnp.bfloat16),
        grid=(Npad // tn,),
        in_specs=[
            pl.BlockSpec((tn, C), lambda i: (i, 0)),
            pl.BlockSpec((C, D), lambda i: (0, 0)),   # weights stay resident
            pl.BlockSpec((1, D), lambda i: (0, 0)),
        ],
        out_specs=pl.BlockSpec((tn, D), lambda i: (i, 0)),
        compiler_params=pltpu.CompilerParams(
            dimension_semantics=("parallel",),
            vmem_limit_bytes=_vmem_limit(est)),
        cost_estimate=pl.CostEstimate(
            flops=flops, transcendentals=0, bytes_accessed=bytes_accessed),
    )(x, w, b)


def _decoder_heads_kernel(qpos_ref, mem_ref, pos_ref,
                          wc_ref, bc_ref, w1_ref, b1_ref,
                          w2_ref, b2_ref, w3_ref, b3_ref,
                          logit_ref, box_ref, *, num_layers, scale):
    # All L single-head cross-attention layers + class head + bbox MLP fused.
    # memory / pos / query_embed / head weights resident in VMEM; per-layer
    # logits/boxes are written as lane-dense 128-padded blocks -> the
    # (L, B, Q, D) hs tensor never touches HBM.
    qpos = qpos_ref[...].astype(jnp.float32)            # (tq, D) f32
    mem = mem_ref[...]                                   # (S, D) bf16
    k = mem + pos_ref[...]                               # (S, D) bf16, computed once

    def layer_body(layer, tgt):
        q = (tgt + qpos).astype(jnp.bfloat16)
        # scores = q @ k^T without materializing a transpose.
        s = lax.dot_general(q, k, (((1,), (1,)), ((), ())),
                            preferred_element_type=jnp.float32) * scale
        s = s - jnp.max(s, axis=-1, keepdims=True)
        p = jnp.exp(s)
        inv = pl.reciprocal(jnp.sum(p, axis=-1, keepdims=True), approx=True)
        p = (p * inv).astype(jnp.bfloat16)
        tgt = tgt + jnp.dot(p, mem, preferred_element_type=jnp.float32)  # residual

        # ---- fused prediction heads on this layer's output ----
        x = tgt.astype(jnp.bfloat16)
        logits = jnp.dot(x, wc_ref[...],
                         preferred_element_type=jnp.float32) + bc_ref[...]
        logit_ref[layer] = logits.astype(logit_ref.dtype)
        h = jnp.maximum(jnp.dot(x, w1_ref[...],
                                preferred_element_type=jnp.float32) + b1_ref[...],
                        0.0).astype(jnp.bfloat16)
        h = jnp.maximum(jnp.dot(h, w2_ref[...],
                                preferred_element_type=jnp.float32) + b2_ref[...],
                        0.0).astype(jnp.bfloat16)
        y = jnp.dot(h, w3_ref[...],
                    preferred_element_type=jnp.float32) + b3_ref[...]
        box_ref[layer] = jax.nn.sigmoid(y).astype(box_ref.dtype)
        return tgt

    lax.fori_loop(0, num_layers, layer_body, jnp.zeros_like(qpos))


def pallas_decoder_heads(query_embed, memory, pos,
                         cls_w, cls_b, w1, b1, w2, b2, w3, b3, num_layers):
    """query_embed: (Qpad, D) f32; memory: (B, S, D) bf16; pos: (S, D) bf16.
       Returns (logits (L, B, Qpad, Pc) f32, boxes (L, B, Qpad, Pb) f32)."""
    B, S, D = memory.shape
    Qpad = query_embed.shape[0]
    Pc = cls_w.shape[1]
    Pb = w3.shape[1]
    H = w1.shape[1]
    tq = _q_tile(Qpad)
    scale = 1.0 / math.sqrt(D)

    steps = B * (Qpad // tq)
    per_step_layer = (2 * tq * S * D * 2 + 2 * tq * D * Pc
                      + 2 * tq * D * H + 2 * tq * H * H + 2 * tq * H * Pb)
    flops = steps * num_layers * per_step_layer
    transcendentals = steps * num_layers * (tq * S + tq * Pb)
    wbytes = (D * Pc + D * H + H * H + H * Pb) * 2 + (Pc + 2 * H + Pb) * 4
    bytes_accessed = (B * S * D * 2 + S * D * 2 + Qpad * D * 4 + wbytes
                      + num_layers * B * Qpad * (Pc + Pb) * 4)
    est = (2 * 2 * S * D * 2          # mem + pos (double-buffered) bf16
           + 2 * tq * D * 4           # query tile
           + wbytes                   # resident head weights
           + 2 * num_layers * tq * (Pc + Pb) * 4   # output blocks
           + 4 * tq * S * 4)          # in-kernel score / prob temporaries

    def _res(shape):
        return pl.BlockSpec(shape, lambda b, q: (0,) * len(shape))

    return pl.pallas_call(
        functools.partial(_decoder_heads_kernel,
                          num_layers=num_layers, scale=scale),
        out_shape=(jax.ShapeDtypeStruct((num_layers, B, Qpad, Pc), jnp.float32),
                   jax.ShapeDtypeStruct((num_layers, B, Qpad, Pb), jnp.float32)),
        grid=(B, Qpad // tq),
        in_specs=[
            pl.BlockSpec((tq, D), lambda b, q: (q, 0)),          # query_embed
            pl.BlockSpec((None, S, D), lambda b, q: (b, 0, 0)),  # memory (2-D in kernel)
            pl.BlockSpec((S, D), lambda b, q: (0, 0)),           # shared sine pos
            _res((D, Pc)), _res((1, Pc)),
            _res((D, H)), _res((1, H)),
            _res((H, H)), _res((1, H)),
            _res((H, Pb)), _res((1, Pb)),
        ],
        out_specs=(
            pl.BlockSpec((num_layers, None, tq, Pc), lambda b, q: (0, b, q, 0)),
            pl.BlockSpec((num_layers, None, tq, Pb), lambda b, q: (0, b, q, 0)),
        ),
        compiler_params=pltpu.CompilerParams(
            dimension_semantics=("parallel", "parallel"),
            vmem_limit_bytes=_vmem_limit(est)),
        cost_estimate=pl.CostEstimate(
            flops=flops, transcendentals=transcendentals,
            bytes_accessed=bytes_accessed),
    )(query_embed, memory, pos, cls_w, cls_b, w1, b1, w2, b2, w3, b3)


# --------------------------------------------------------------------------
# DETR wrapper (glue in plain JAX, hot path in Pallas)
# --------------------------------------------------------------------------

class DETRPallas:
    def __init__(self, num_classes, num_queries, hidden_dim,
                 backbone_channels, num_decoder_layers=3, seed=42):
        assert hidden_dim % 2 == 0
        self.num_classes = num_classes
        self.num_queries = num_queries
        self.hidden_dim = hidden_dim
        self.backbone_channels = backbone_channels
        self.num_decoder_layers = num_decoder_layers

        keys = jax.random.split(jax.random.PRNGKey(seed), 16)

        def init(k, shape, scale=0.05):
            return (scale * jax.random.normal(k, shape)).astype(jnp.float32)

        D, C, Q = hidden_dim, backbone_channels, num_queries
        Ccls = num_classes + 1
        self.pad_cls = _pad128(Ccls)
        self.pad_box = _pad128(4)
        self.q_pad = _round_up(Q, 8)

        def pad_cols(w, width):
            return jnp.pad(w, ((0, 0), (0, width - w.shape[1])))

        cls_w = init(keys[3], (D, Ccls))
        cls_b = init(keys[4], (1, Ccls))
        w3 = init(keys[9], (D, 4))
        b3 = init(keys[10], (1, 4))
        qe = init(keys[11], (Q, D), scale=1.0)

        self.p = {
            # backbone stub channel projection (glue, deterministic)
            "bb_w": init(keys[0], (3, C)),
            # input_proj : Conv2d(C, D, 1) stored as (in, out); bf16 operand
            "proj_w": init(keys[1], (C, D)).astype(jnp.bfloat16),
            "proj_b": init(keys[2], (1, D)),
            # class_embed : Linear(D, num_classes + 1), lane-padded to 128
            "cls_w": pad_cols(cls_w, self.pad_cls).astype(jnp.bfloat16),
            "cls_b": pad_cols(cls_b, self.pad_cls),
            # bbox_embed : MLP(D, D, 4, 3), final layer lane-padded to 128
            "bb1_w": init(keys[5], (D, D)).astype(jnp.bfloat16),
            "bb1_b": init(keys[6], (1, D)),
            "bb2_w": init(keys[7], (D, D)).astype(jnp.bfloat16),
            "bb2_b": init(keys[8], (1, D)),
            "bb3_w": pad_cols(w3, self.pad_box).astype(jnp.bfloat16),
            "bb3_b": pad_cols(b3, self.pad_box),
            # query_embed : Embedding(num_queries, D), rows padded to mult of 8
            "query_embed": jnp.pad(qe, ((0, self.q_pad - Q), (0, 0))),
        }

    # ---- backbone stub: TODO(synk): real ResNet backbone is external ----
    def _backbone(self, samples):
        B, _, Hi, Wi = samples.shape
        H, W = Hi // 4, Wi // 4
        # NCHW -> NHWC once, pool + project in NHWC; bf16 cast fused at producer.
        x = jnp.transpose(samples, (0, 2, 3, 1))                     # (B,Hi,Wi,3)
        pooled = x.reshape(B, H, 4, W, 4, 3).mean(axis=(2, 4))       # (B,H,W,3)
        src = jnp.einsum("bhwc,cd->bhwd", pooled,
                         self.p["bb_w"]).astype(jnp.bfloat16)        # (B,H,W,C) bf16
        src_rows = src.reshape(B * H * W, self.backbone_channels)    # (BHW, C)
        pos = self._sine_pos(H, W).astype(jnp.bfloat16)              # (HW, D), shared
        # TODO(synk): NestedTensor padding mask not modeled (all-valid mask).
        return src_rows, pos, H, W

    def _sine_pos(self, H, W):
        D = self.hidden_dim
        npf = D // 2
        y = jnp.arange(1, H + 1, dtype=jnp.float32) / (H + 1e-6) * (2 * math.pi)
        x = jnp.arange(1, W + 1, dtype=jnp.float32) / (W + 1e-6) * (2 * math.pi)
        dim_t = 10000.0 ** (2 * (jnp.arange(npf) // 2) / npf)
        px = x[:, None] / dim_t                                      # (W, npf)
        py = y[:, None] / dim_t                                      # (H, npf)
        px = jnp.concatenate([jnp.sin(px[:, 0::2]), jnp.cos(px[:, 1::2])], axis=-1)
        py = jnp.concatenate([jnp.sin(py[:, 0::2]), jnp.cos(py[:, 1::2])], axis=-1)
        pos = jnp.concatenate(
            [jnp.broadcast_to(py[:, None, :], (H, W, npf)),
             jnp.broadcast_to(px[None, :, :], (H, W, npf))], axis=-1)  # (H,W,D)
        return pos.reshape(H * W, D)                                   # (HW, D)

    def __call__(self, samples):
        D, Q, L = self.hidden_dim, self.num_queries, self.num_decoder_layers
        B = samples.shape[0]

        # backbone (stub), row-major (rows, channels) bf16 activations
        src_rows, pos, H, W = self._backbone(samples)
        S = H * W
        N = B * S

        # ---- input_proj : 1x1 conv == per-pixel matmul ----
        tn = _row_tile(N)
        Npad = _round_up(N, tn)
        if Npad != N:
            src_rows = jnp.pad(src_rows, ((0, Npad - N), (0, 0)))
        mem_rows = pallas_input_proj(src_rows, self.p["proj_w"],
                                     self.p["proj_b"], tn)            # (Npad,D) bf16
        memory = mem_rows[:N].reshape(B, S, D)                        # bf16

        # ---- fused decoder stub + class head + bbox MLP (one pallas_call) ----
        # TODO(synk): prepare_for_dn / attn_mask not implemented (eval path).
        logits_pad, boxes_pad = pallas_decoder_heads(
            self.p["query_embed"], memory, pos,
            self.p["cls_w"], self.p["cls_b"],
            self.p["bb1_w"], self.p["bb1_b"],
            self.p["bb2_w"], self.p["bb2_b"],
            self.p["bb3_w"], self.p["bb3_b"], L)

        logits = logits_pad[:, :, :Q, :self.num_classes + 1]          # pred_logits
        boxes = boxes_pad[:, :, :Q, :4]                               # sigmoid boxes

        out = {"pred_logits": logits[-1], "pred_boxes": boxes[-1]}
        out["aux_outputs"] = [
            {"pred_logits": a, "pred_boxes": b}
            for a, b in zip(logits[:-1], boxes[:-1])
        ]
        return out


# --------------------------------------------------------------------------

if __name__ == "__main__":
    key = jax.random.PRNGKey(0)
    # samples: batched images [batch_size x 3 x H x W] (NCHW)
    samples = jax.random.normal(key, (2, 3, 32, 32), dtype=jnp.float32)

    model = DETRPallas(num_classes=10, num_queries=8, hidden_dim=32,
                       backbone_channels=8, num_decoder_layers=3)

    out = model(samples)
    jax.block_until_ready(out["pred_logits"])
    jax.block_until_ready(out["pred_boxes"])

    assert out["pred_logits"].shape == (2, 8, 11)
    assert out["pred_boxes"].shape == (2, 8, 4)
    assert len(out["aux_outputs"]) == 2
    assert bool(jnp.all(jnp.isfinite(out["pred_logits"])))
    assert bool(jnp.all((out["pred_boxes"] >= 0.0) & (out["pred_boxes"] <= 1.0)))

    print("KERNEL_OK")
</pallas_src>

<mosaic_0001>
module attributes {stable_mosaic.version = 11 : i64} {
  func.func @_input_proj_kernel(%arg0: i32, %arg1: memref<64x8xbf16, #tpu.memory_space<vmem>>, %arg2: memref<8x32xbf16, #tpu.memory_space<vmem>>, %arg3: memref<1x32xf32, #tpu.memory_space<vmem>>, %arg4: memref<64x32xbf16, #tpu.memory_space<vmem>>) attributes {dimension_semantics = [#tpu.dimension_semantics<parallel>], iteration_bounds = array<i64: 2>, scalar_prefetch = 0 : i64, scratch_operands = 0 : i64, tpu.core_type = #tpu.core_type<tc>, window_params = [{transform_indices = @transform_0, window_bounds = array<i64: 64, 8>}, {pipeline_mode = #tpu.pipeline_mode<synchronous>, transform_indices = @transform_1, window_bounds = array<i64: 8, 32>}, {pipeline_mode = #tpu.pipeline_mode<synchronous>, transform_indices = @transform_2, window_bounds = array<i64: 1, 32>}, {transform_indices = @transform_3, window_bounds = array<i64: 64, 32>}]} {
    %c0 = arith.constant 0 : index
    %c0_0 = arith.constant 0 : index
    %0 = vector.load %arg1[%c0, %c0_0] : memref<64x8xbf16, #tpu.memory_space<vmem>>, vector<64x8xbf16>
    %c0_1 = arith.constant 0 : index
    %c0_2 = arith.constant 0 : index
    %1 = vector.load %arg2[%c0_1, %c0_2] : memref<8x32xbf16, #tpu.memory_space<vmem>>, vector<8x32xbf16>
    %cst = arith.constant dense<0.000000e+00> : vector<64x32xf32>
    %2 = tpu.matmul %0, %1, %cst {dimension_numbers = #tpu.dot_dimension_numbers<[1], [0], [0], [1], [0, 0, 1, 1], [], []>} : vector<64x8xbf16>, vector<8x32xbf16>, vector<64x32xf32> -> vector<64x32xf32>
    %c0_3 = arith.constant 0 : index
    %c0_4 = arith.constant 0 : index
    %3 = vector.load %arg3[%c0_3, %c0_4] : memref<1x32xf32, #tpu.memory_space<vmem>>, vector<1x32xf32>
    %4 = vector.broadcast %3 : vector<1x32xf32> to vector<64x32xf32>
    %5 = arith.addf %2, %4 : vector<64x32xf32>
    %6 = arith.truncf %5 : vector<64x32xf32> to vector<64x32xbf16>
    %c0_5 = arith.constant 0 : index
    %c0_6 = arith.constant 0 : index
    %7 = vector.load %arg4[%c0_5, %c0_6] : memref<64x32xbf16, #tpu.memory_space<vmem>>, vector<64x32xbf16>
    tpu.vector_store %arg4[%c0_5, %c0_6], %6 {strides = array<i32>} : memref<64x32xbf16, #tpu.memory_space<vmem>>, vector<64x32xbf16>,
    return
  }
  func.func @transform_0(%arg0: i32) -> (i32, i32) {
    %c0_i32 = arith.constant 0 : i32
    %c0_i32_0 = arith.constant 0 : i32
    return %arg0, %c0_i32 : i32, i32
  }
  func.func @transform_1(%arg0: i32) -> (i32, i32) {
    %c0_i32 = arith.constant 0 : i32
    %c0_i32_0 = arith.constant 0 : i32
    %c0_i32_1 = arith.constant 0 : i32
    return %c0_i32, %c0_i32_0 : i32, i32
  }
  func.func @transform_2(%arg0: i32) -> (i32, i32) {
    %c0_i32 = arith.constant 0 : i32
    %c0_i32_0 = arith.constant 0 : i32
    %c0_i32_1 = arith.constant 0 : i32
    return %c0_i32, %c0_i32_0 : i32, i32
  }
  func.func @transform_3(%arg0: i32) -> (i32, i32) {
    %c0_i32 = arith.constant 0 : i32
    %c0_i32_0 = arith.constant 0 : i32
    return %arg0, %c0_i32 : i32, i32
  }
}

</mosaic_0001>

<llo_original>
// kernel: tpu_custom_call.1
$region0: #{tpu_custom_call.1}
  #allocation0 [shape = 'u32[]', space=smem, size = 0x4, offset = 0x4, fixed_abs, tag = 'smem constant byte address 0x4 - core index']
  #allocation1 [shape = 'u32[72,128]{1,0:T(1,128)}', space=vmem, size = 0x9000, scoped, tag = 'internal scratch']
  %s0 = inlined_call_operand.vmem [shape: bf16[128,8], index: 0, kind: input, shape index: {}]
  %s1 = inlined_call_operand.vmem [shape: bf16[8,32], index: 1, kind: input, shape index: {}]
  %s2 = inlined_call_operand.vmem [shape: f32[1,32], index: 2, kind: input, shape index: {}]
  %s3 = inlined_call_operand.vmem [shape: bf16[128,32], index: 3, kind: output, shape index: {}]
  %s4 = sld [smem:[#allocation0]]
  $region45: #{tpu_custom_call.1} parent=0
    _
  %s6 = ssub.s32 1, %s4
  %s7 = scalar_select 0, %s6, %s4
  loop: start=0, step=1, limit=4
  $region2: #{tpu_custom_call.1} parent=0 // loop_pre_header
    _
  $region3: #{tpu_custom_call.1} parent=0 // loop_header
    %s9 = sphi 0, %s13
    %p10 = scmp.ge.s32.totalorder %s9, 4
    %s19 = sphi 0, %s21
    %s22 = sphi 0, %s19
    %s23 = sphi 0, %s22
    %s39 = sphi 0, %s23
    %s43 = sphi 0, %s43
    %s45 = sphi 0, %s43
    %s46 = sphi 0, %s45
    %s60 = sphi 0, %s46
    %s64 = sphi 0, %s64
    %s66 = sphi 0, %s64
    %s67 = sphi 0, %s66
    %s81 = sphi 0, %s67
    %s87 = sphi 0, %s89
    %s90 = sphi 0, %s87
    %s91 = sphi 0, %s90
    %s107 = sphi 0, %s91
  $region4: #{tpu_custom_call.1} parent=0 // loop_header_branch
    %12 = sbr.rel (%p10) target = $region8
  $region5: #{tpu_custom_call.1} parent=0 // loop_body
    %s14 = ssub.s32 %s9, 1
    %s15 = ssub.s32 %s9, 2
    %s16 = sadd.s32 %s9, 1
    %s17 = ssub.s32 %s9, %s16
    %p18 = scmp.eq.s32.totalorder %s17, 0
    %s20 = sadd.s32 %s19, 1
    %s21 = scalar_select %p18, %s19, %s20
    %p24 = pneg %p18
    %p25 = scmp.eq.s32.totalorder %s9, 1
    %p26 = por %p24, %p25
    %p27 = scmp.ne.s32.totalorder %s19, %s22
    %p28 = scmp.eq.s32.totalorder %s9, 0
    %p29 = por %p27, %p28
    %p30 = scmp.ne.s32.totalorder %s19, %s22
    %p31 = scmp.eq.s32.totalorder %s14, 1
    %p32 = por %p30, %p31
    %p33 = scmp.ne.s32.totalorder %s22, %s23
    %p34 = scmp.eq.s32.totalorder %s14, 0
    %p35 = por %p33, %p34
    %p36 = scmp.ne.s32.totalorder %s22, %s23
    %p37 = scmp.eq.s32.totalorder %s15, 1
    %p38 = por %p36, %p37
    %p40 = scmp.ne.s32.totalorder %s23, %s39
    %p41 = scmp.eq.s32.totalorder %s15, 0
    %p42 = por %p40, %p41
    %s44 = sadd.s32 %s43, 1
    %p47 = scmp.eq.s32.totalorder %s9, 1
    %p48 = scmp.ne.s32.totalorder %s43, %s45
    %p49 = scmp.eq.s32.totalorder %s9, 0
    %p50 = por %p48, %p49
    %p51 = scmp.ne.s32.totalorder %s43, %s45
    %p52 = scmp.eq.s32.totalorder %s14, 1
    %p53 = por %p51, %p52
    %p54 = scmp.ne.s32.totalorder %s45, %s46
    %p55 = scmp.eq.s32.totalorder %s14, 0
    %p56 = por %p54, %p55
    %p57 = scmp.ne.s32.totalorder %s45, %s46
    %p58 = scmp.eq.s32.totalorder %s15, 1
    %p59 = por %p57, %p58
    %p61 = scmp.ne.s32.totalorder %s46, %s60
    %p62 = scmp.eq.s32.totalorder %s15, 0
    %p63 = por %p61, %p62
    %s65 = sadd.s32 %s64, 1
    %p68 = scmp.eq.s32.totalorder %s9, 1
    %p69 = scmp.ne.s32.totalorder %s64, %s66
    %p70 = scmp.eq.s32.totalorder %s9, 0
    %p71 = por %p69, %p70
    %p72 = scmp.ne.s32.totalorder %s64, %s66
    %p73 = scmp.eq.s32.totalorder %s14, 1
    %p74 = por %p72, %p73
    %p75 = scmp.ne.s32.totalorder %s66, %s67
    %p76 = scmp.eq.s32.totalorder %s14, 0
    %p77 = por %p75, %p76
    %p78 = scmp.ne.s32.totalorder %s66, %s67
    %p79 = scmp.eq.s32.totalorder %s15, 1
    %p80 = por %p78, %p79
    %p82 = scmp.ne.s32.totalorder %s67, %s81
    %p83 = scmp.eq.s32.totalorder %s15, 0
    %p84 = por %p82, %p83
    %s85 = ssub.s32 %s9, %s16
    %p86 = scmp.eq.s32.totalorder %s85, 0
    %s88 = sadd.s32 %s87, 1
    %s89 = scalar_select %p86, %s87, %s88
    %p92 = pneg %p86
    %p93 = scmp.eq.s32.totalorder %s9, 1
    %p94 = por %p92, %p93
    %p95 = scmp.ne.s32.totalorder %s87, %s90
    %p96 = scmp.eq.s32.totalorder %s9, 0
    %p97 = por %p95, %p96
    %p98 = scmp.ne.s32.totalorder %s87, %s90
    %p99 = scmp.eq.s32.totalorder %s14, 1
    %p100 = por %p98, %p99
    %p101 = scmp.ne.s32.totalorder %s90, %s91
    %p102 = scmp.eq.s32.totalorder %s14, 0
    %p103 = por %p101, %p102
    %p104 = scmp.ne.s32.totalorder %s90, %s91
    %p105 = scmp.eq.s32.totalorder %s15, 1
    %p106 = por %p104, %p105
    %p108 = scmp.ne.s32.totalorder %s91, %s107
    %p109 = scmp.eq.s32.totalorder %s15, 0
    %p110 = por %p108, %p109
    %p111 = scmp.le.s32.totalorder 1, %s9
    %p112 = scmp.lt.s32.totalorder %s9, 3
    %p113 = pnand %p111, %p112
    %p114 = pneg %p113
    // Predicated region
    $region9: #{tpu_custom_call.1} parent=5 // pred_check
      _
    $region10: #{tpu_custom_call.1} parent=5 // pred_check_branch
      %116 = sbr.rel (%p113) target = $region12
    $region11: #{tpu_custom_call.1} parent=5 // pred_region
      %s117 = ssub.s32 %s9, 1
      // Predicated region
      $region13: #{tpu_custom_call.1} parent=11 // pred_check
        %p118 = pneg %p56
      $region14: #{tpu_custom_call.1} parent=11 // pred_check_branch
        %120 = sbr.rel (%p118) target = $region16
      $region15: #{tpu_custom_call.1} parent=11 // pred_region
        _
      $region16: #{tpu_custom_call.1} parent=11 // pred_fallthru
        _
      // Predicated region
      $region17: #{tpu_custom_call.1} parent=11 // pred_check
        %p121 = pneg %p77
      $region18: #{tpu_custom_call.1} parent=11 // pred_check_branch
        %123 = sbr.rel (%p121) target = $region20
      $region19: #{tpu_custom_call.1} parent=11 // pred_region
        _
      $region20: #{tpu_custom_call.1} parent=11 // pred_fallthru
        _
    $region12: #{tpu_custom_call.1} parent=5 // pred_fallthru
      _
    %p124 = scmp.lt.s32.totalorder %s9, 2
    // Predicated region
    $region21: #{tpu_custom_call.1} parent=5 // pred_check
      %p125 = pneg %p124
    $region22: #{tpu_custom_call.1} parent=5 // pred_check_branch
      %127 = sbr.rel (%p125) target = $region24
    $region23: #{tpu_custom_call.1} parent=5 // pred_region
      // Predicated region
      $region25: #{tpu_custom_call.1} parent=23 // pred_check
        %p128 = pneg %p29
      $region26: #{tpu_custom_call.1} parent=23 // pred_check_branch
        %130 = sbr.rel (%p128) target = $region28
      $region27: #{tpu_custom_call.1} parent=23 // pred_region
        %s131 = smul.u32 8, %s9
        %p132 = scmp.lt.s32.totalorder %s131, 15
        %s133 = scalar_select %p132, %s131, 15
        %s134 = smul.addr %s133, 4
        %s135 = scalar_lea.vmem %s0, %s134
        %s136 = smul.u32 8, %s9
      $region28: #{tpu_custom_call.1} parent=23 // pred_fallthru
        _
    $region24: #{tpu_custom_call.1} parent=5 // pred_fallthru
      _
    %p137 = scmp.le.s32.totalorder 1, %s9
    %p138 = scmp.lt.s32.totalorder %s9, 3
    %p139 = pnand %p137, %p138
    %p140 = pneg %p139
    // Predicated region
    $region29: #{tpu_custom_call.1} parent=5 // pred_check
      _
    $region30: #{tpu_custom_call.1} parent=5 // pred_check_branch
      %142 = sbr.rel (%p139) target = $region32
    $region31: #{tpu_custom_call.1} parent=5 // pred_region
      %s143 = ssub.s32 %s9, 1
      %s144 = smul.u32 8, %s14
      %p145 = scmp.lt.s32.totalorder %s144, 15
      %s146 = scalar_select %p145, %s144, 15
      %s147 = smul.addr %s146, 4
      %s148 = scalar_lea.vmem %s0, %s147
      %p149 = pneg %p35
      %p150 = pneg %p32
      %p151 = pneg %p56
      %p152 = pneg %p53
      %p153 = pneg %p77
      %p154 = pneg %p74
      %p155 = pneg %p103
      %p156 = pneg %p100
      %s157 = smul.u32 8, %s14
      %p158 = scmp.lt.s32.totalorder %s157, 15
      %s159 = scalar_select %p158, %s157, 15
      %s160 = smul.addr %s159, 4
      %s161 = scalar_lea.vmem %s3, %s160
      %s162 = smul.u32 8, %s14
      %p163 = scmp.lt.s32.totalorder %s162, 15
      %s164 = scalar_select %p163, %s162, 15
      %s165 = smul.addr %s164, 4
      %s166 = scalar_lea.vmem %s0, %s165
      %s167 = smul.u32 8, %s14
      %s168 = smul.u32 8, %s14
      %p169 = scmp.lt.s32.totalorder %s168, 15
      %s170 = scalar_select %p169, %s168, 15
      %s171 = smul.addr %s170, 4
      %s172 = scalar_lea.vmem %s3, %s171
      %s173 = smul.u32 8, %s14
      %v175 = vld [vmem:[%s166] sm:$0xf]
      %v176 = vld [vmem:[%s166 + $0x4] sm:$0xf]
      %v177 = vld [vmem:[%s166 + $0x8] sm:$0xf]
      %v178 = vld [vmem:[%s166 + $0xc] sm:$0xf]
      %v179 = vld [vmem:[%s166 + $0x10] sm:$0xf]
      %v180 = vld [vmem:[%s166 + $0x14] sm:$0xf]
      %v181 = vld [vmem:[%s166 + $0x18] sm:$0xf]
      %v182 = vld [vmem:[%s166 + $0x1c] sm:$0xf]
      %v183 = vld [vmem:[%s1] sm:$0xf]
      %v184 = vld [vmem:[%s2] sm:$0x1]
      %v186 = vperm.slane %v184, 0
      %v196 = vunpack.c.l.b16 %v175
      %v197 = vunpack.c.l.b16 %v176
      %v198 = vunpack.c.l.b16 %v177
      %v199 = vunpack.c.l.b16 %v178
      %v200 = vunpack.c.l.b16 %v179
      %v201 = vunpack.c.l.b16 %v180
      %v202 = vunpack.c.l.b16 %v181
      %v203 = vunpack.c.l.b16 %v182
      %v204 = vpack.c.b16 %v197, %v196
      %v205 = vpack.c.b16 %v199, %v198
      %v206 = vpack.c.b16 %v201, %v200
      %v207 = vpack.c.b16 %v203, %v202
      %vm208 = vcmask 64512
      %v210 = vsel %vm208, %v204, 0
      %v213 = vsel %vm208, %v205, 0
      %v216 = vsel %vm208, %v206, 0
      %v219 = vsel %vm208, %v207, 0
      %vm221 = vcmask 1043456
      %v223 = vsel %vm221, %v183, 0
      %225 = vmatpush.bf16.msra.mxu0 0
      %226 = vmatpush.bf16.msra.mxu0 0
      %227 = vmatpush.bf16.msra.mxu0 0
      %228 = vmatpush.bf16.msra.mxu0 0
      %229 = vmatpush.bf16.msra.mxu0 0
      %230 = vmatpush.bf16.msra.mxu0 0
      %231 = vmatpush.bf16.msra.mxu0 0
      %232 = vmatpush.bf16.msra.mxu0 %v223
      %233 = vmatmul.bf16.gmra.mxu0 %v210
      %v234 = vpop.f32.mrf.mxu0
      %v235 = vadd.f32 %v186, %v234
      %v236 = vpop.f32.mrf.mxu0
      %v237 = vadd.f32 %v186, %v236
      %238 = vmatmul.bf16.gmra.mxu0 %v213
      %v239 = vpop.f32.mrf.mxu0
      %v240 = vadd.f32 %v186, %v239
      %v241 = vpop.f32.mrf.mxu0
      %v242 = vadd.f32 %v186, %v241
      %243 = vmatmul.bf16.gmra.mxu0 %v216
      %v244 = vpop.f32.mrf.mxu0
      %v245 = vadd.f32 %v186, %v244
      %v246 = vpop.f32.mrf.mxu0
      %v247 = vadd.f32 %v186, %v246
      %248 = vmatmul.bf16.gmra.mxu0 %v219
      %v249 = vpop.f32.mrf.mxu0
      %v250 = vadd.f32 %v186, %v249
      %v251 = vpop.f32.mrf.mxu0
      %v252 = vadd.f32 %v186, %v251
      %253 = vdwg.mxu0
      %v254 = vpack.c.bf16 %v235, %v235
      %v255 = vpack.c.bf16 %v237, %v237
      %v256 = vpack.c.bf16 %v240, %v240
      %v257 = vpack.c.bf16 %v242, %v242
      %v258 = vpack.c.bf16 %v245, %v245
      %v259 = vpack.c.bf16 %v247, %v247
      %v260 = vpack.c.bf16 %v250, %v250
      %v261 = vpack.c.bf16 %v252, %v252
      %vm262 = vcmask 257024
      %263 = vst.msk [vmem:[%s172] sm:$0xf] %vm262, %v254
      %264 = vst.msk [vmem:[%s172 + $0x4] sm:$0xf] %vm262, %v255
      %265 = vst.msk [vmem:[%s172 + $0x8] sm:$0xf] %vm262, %v256
      %266 = vst.msk [vmem:[%s172 + $0xc] sm:$0xf] %vm262, %v257
      %267 = vst.msk [vmem:[%s172 + $0x10] sm:$0xf] %vm262, %v258
      %268 = vst.msk [vmem:[%s172 + $0x14] sm:$0xf] %vm262, %v259
      %269 = vst.msk [vmem:[%s172 + $0x18] sm:$0xf] %vm262, %v260
      %270 = vst.msk [vmem:[%s172 + $0x1c] sm:$0xf] %vm262, %v261
      %s271 = smul.u32 8, %s14
      %p272 = scmp.lt.s32.totalorder %s271, 15
      %s273 = scalar_select %p272, %s271, 15
      %s274 = smul.addr %s273, 4
      %s275 = scalar_lea.vmem %s3, %s274
      // Predicated region
      $region33: #{tpu_custom_call.1} parent=31 // pred_check
        %p276 = pneg %p100
      $region34: #{tpu_custom_call.1} parent=31 // pred_check_branch
        %278 = sbr.rel (%p276) target = $region36
      $region35: #{tpu_custom_call.1} parent=31 // pred_region
        %s279 = smul.u32 8, %s14
      $region36: #{tpu_custom_call.1} parent=31 // pred_fallthru
        _
    $region32: #{tpu_custom_call.1} parent=5 // pred_fallthru
      _
    %p280 = scmp.le.s32.totalorder 2, %s9
    // Predicated region
    $region37: #{tpu_custom_call.1} parent=5 // pred_check
      %p281 = pneg %p280
    $region38: #{tpu_custom_call.1} parent=5 // pred_check_branch
      %283 = sbr.rel (%p281) target = $region40
    $region39: #{tpu_custom_call.1} parent=5 // pred_region
      %s284 = ssub.s32 %s9, 2
      // Predicated region
      $region41: #{tpu_custom_call.1} parent=39 // pred_check
        %p285 = pneg %p106
      $region42: #{tpu_custom_call.1} parent=39 // pred_check_branch
        %287 = sbr.rel (%p285) target = $region44
      $region43: #{tpu_custom_call.1} parent=39 // pred_region
        %s288 = smul.u32 8, %s15
        %p289 = scmp.lt.s32.totalorder %s288, 15
        %s290 = scalar_select %p289, %s288, 15
        %s291 = smul.addr %s290, 4
        %s292 = scalar_lea.vmem %s3, %s291
      $region44: #{tpu_custom_call.1} parent=39 // pred_fallthru
        _
    $region40: #{tpu_custom_call.1} parent=5 // pred_fallthru
      _
  $region6: #{tpu_custom_call.1} parent=0 // loop_footer
    %s13 = sadd.s32 1, %s9
  $region7: #{tpu_custom_call.1} parent=0 // loop_footer_branch
    %8 = sbr.rel target = $region3
  $region8: #{tpu_custom_call.1} parent=0 // loop_exit
    _

</llo_original>
